<compile_context>
chip_gen: v6e
topology: v6e:2x2x1
jax: 0.10.0
libtpu: 0.0.40
codegen_flags: <defaults>
</compile_context>

<pallas_src>
import jax
import jax.numpy as jnp
from jax.experimental import pallas as pl
from jax.experimental.pallas import tpu as pltpu

_MIB = 1024 * 1024


def _round_up(x, m):
    return ((x + m - 1) // m) * m


def _sublane_quantum(dtype):
    # Sublane packing quantum: 8 for 4-byte, 16 for 2-byte, 32 for 1-byte dtypes.
    return max(8, 32 // jnp.dtype(dtype).itemsize)


def _pick_tile(total, quantum, max_tile):
    """Largest divisor of `total` that is a multiple of `quantum` and <= max_tile (None if none)."""
    t = (min(max_tile, total) // quantum) * quantum
    while t >= quantum:
        if total % t == 0:
            return t
        t -= quantum
    return None


def _device_kind():
    try:
        return jax.devices()[0].device_kind.lower()
    except Exception:  # defensive: never fail tile planning on introspection
        return ""


def _target_tile_bytes(kind):
    if "v7" in kind:
        return 4 * _MIB          # 3.2 TB/s HBM: bigger tiles hide the ~0.35 us/step overhead
    if "v6" in kind:
        return 2 * _MIB
    return 1 * _MIB              # v5e / unknown: ~1 MiB already sits at the HBM roofline


# ----------------------------- Pass-1 kernels (spatial mean) -----------------------------

def _make_mean_kernel_lanewise(n_chunks, inv_hw):
    """For HT % 128 == 0: lane-dense partial sums in VMEM scratch, cross-lane reduce once."""

    def kernel(x_ref, mean_ref, acc_ref):
        j = pl.program_id(1)

        @pl.when(j == 0)
        def _():
            acc_ref[...] = jnp.zeros_like(acc_ref)

        part = x_ref[:, 0:128].astype(jnp.float32)
        for k in range(1, n_chunks):                       # static unroll: pure VPU adds
            part = part + x_ref[:, k * 128:(k + 1) * 128].astype(jnp.float32)
        acc_ref[...] += part

        @pl.when(j == pl.num_programs(1) - 1)
        def _():
            mean_ref[...] = (jnp.sum(acc_ref[...], axis=-1, keepdims=True)
                             * jnp.float32(inv_hw))

    return kernel


def _make_mean_kernel_fulldim(inv_hw):
    """For a single full-width (possibly non-128-aligned) HW block."""

    def kernel(x_ref, mean_ref):
        mean_ref[...] = (jnp.sum(x_ref[...].astype(jnp.float32), axis=-1, keepdims=True)
                         * jnp.float32(inv_hw))

    return kernel


# ----------------------------- Pass-2 kernel (broadcast scale) ---------------------------

def _scale_kernel(x_ref, g_ref, o_ref):
    # Pure VPU stream: multiply each row tile by its per-row gate (already in x dtype).
    o_ref[...] = x_ref[...] * g_ref[...]


# ----------------------------------- Wrapper ---------------------------------------------

def local_forward(x_nchw, w1, b1, w2, b2, *,
                  rows_tile_max=256, hw_tile_max=None, donate_x=False):
    """x: (N, C, H, W);  w1: (hidden, C);  b1: (hidden,);  w2: (C, hidden);  b2: (C,)."""
    N, C, H, W = x_nchw.shape
    R, HW = N * C, H * W
    dtype = x_nchw.dtype
    itemsize = jnp.dtype(dtype).itemsize
    q = _sublane_quantum(dtype)
    kind = _device_kind()
    tile_bytes = _target_tile_bytes(kind)

    # ---- Row tile: exact divisor of R, multiple of the sublane quantum ----
    rt_cap = rows_tile_max
    if "v7" in kind and R >= 2 * q:
        # 2 TensorCores: keep >= 2 row blocks so pass 1's "parallel" axis shards across cores.
        rt_cap = min(rt_cap, max(q, (R // 2) // q * q))
    RT = _pick_tile(R, q, rt_cap)
    pad_rows = 0
    if RT is None:
        if R <= 4 * rows_tile_max:
            RT = R                        # full (possibly unaligned) row extent: legal block shape
        else:
            RT = max(q, (rt_cap // q) * q)   # pathological shape: rare padding fallback
            pad_rows = _round_up(R, RT) - R

    # ---- Spatial tile: exact divisor of HW, multiple of 128, sized for ~tile_bytes ----
    if hw_tile_max is None:
        hw_tile_max = max(128, (tile_bytes // max(RT * itemsize, 1)) // 128 * 128)
    HT = _pick_tile(HW, 128, hw_tile_max)
    pad_cols = 0
    if HT is None:
        if HW <= max(2 * hw_tile_max, 4096):
            HT = HW                       # small / odd spatial extent: one full-width block
        else:
            HT = hw_tile_max              # pathological shape: rare padding fallback
            pad_cols = _round_up(HW, HT) - HW

    R_p, HW_p = R + pad_rows, HW + pad_cols

    # Lane-dense 2D layout: rows = N*C (sublanes), spatial = H*W (lanes).
    x2d = x_nchw.reshape(R, HW)
    if pad_rows or pad_cols:
        # Rare fallback: zero columns don't perturb the sums (we divide by the true HW),
        # padded rows are sliced away below.
        x2d = jnp.pad(x2d, ((0, pad_rows), (0, pad_cols)))

    grid = (R_p // RT, HW_p // HT)
    tile_hbm = RT * HT * itemsize

    def _compiler_params(semantics, footprint_bytes):
        vmem_limit = None
        if footprint_bytes > 12 * _MIB:   # nearing the smallest scoped-VMEM default (v5e: 16 MiB)
            vmem_limit = min(int(2 * footprint_bytes), 100 * _MIB)
        return pltpu.CompilerParams(dimension_semantics=semantics,
                                    vmem_limit_bytes=vmem_limit)

    # ---- Pass 1: per-(n, c) spatial means ----
    if HT % 128 == 0:
        mean_kernel = _make_mean_kernel_lanewise(HT // 128, 1.0 / HW)
        scratch = [pltpu.VMEM((RT, 128), jnp.float32)]
        p1_footprint = 2 * tile_hbm + RT * 128 * 4
    else:
        mean_kernel = _make_mean_kernel_fulldim(1.0 / HW)     # single HW step in this case
        scratch = []
        p1_footprint = 2 * tile_hbm

    row_means = pl.pallas_call(
        mean_kernel,
        out_shape=jax.ShapeDtypeStruct((R_p, 1), jnp.float32),
        grid_spec=pltpu.PrefetchScalarGridSpec(
            num_scalar_prefetch=0,
            grid=grid,
            in_specs=[pl.BlockSpec((RT, HT), lambda i, j: (i, j))],
            out_specs=pl.BlockSpec((RT, 1), lambda i, j: (i, 0)),
            scratch_shapes=scratch,
        ),
        compiler_params=_compiler_params(("parallel", "arbitrary"), p1_footprint),
        cost_estimate=pl.CostEstimate(flops=R_p * HW_p, transcendentals=0,
                                      bytes_accessed=R_p * HW_p * itemsize + R_p * 4),
    )(x2d)

    # ---- Gate MLP (degenerate (N,C)@(C,hidden) sizes): plain JAX, hoisted off the kernels ----
    mean = row_means[:R, 0].reshape(N, C)                                          # (N, C) f32
    h = jnp.maximum(mean @ w1.astype(jnp.float32).T + b1.astype(jnp.float32), 0.0)
    gate = jax.nn.sigmoid(h @ w2.astype(jnp.float32).T + b2.astype(jnp.float32))   # (N, C) f32

    # NOTE: gate is cast to x.dtype once here; for sub-f32 inputs (bf16/fp8) this rounds the gate
    # before the multiply, a tiny documented deviation from "f32 multiply then cast".
    g_rows = gate.astype(dtype).reshape(R, 1)
    if pad_rows:
        g_rows = jnp.pad(g_rows, ((0, pad_rows), (0, 0)))

    # ---- Pass 2: x * gate, streamed in lane-dense tiles ----
    out2d = pl.pallas_call(
        _scale_kernel,
        out_shape=jax.ShapeDtypeStruct((R_p, HW_p), dtype),
        grid_spec=pltpu.PrefetchScalarGridSpec(
            num_scalar_prefetch=0,
            grid=grid,
            in_specs=[
                pl.BlockSpec((RT, HT), lambda i, j: (i, j)),   # x tile
                pl.BlockSpec((RT, 1), lambda i, j: (i, 0)),    # per-row gate
            ],
            out_specs=pl.BlockSpec((RT, HT), lambda i, j: (i, j)),
        ),
        compiler_params=_compiler_params(("parallel", "parallel"), 4 * tile_hbm),
        cost_estimate=pl.CostEstimate(flops=R_p * HW_p, transcendentals=0,
                                      bytes_accessed=2 * R_p * HW_p * itemsize + R_p * itemsize),
        input_output_aliases=({0: 0} if donate_x else {}),
    )(x2d, g_rows)

    if pad_rows or pad_cols:
        out2d = out2d[:R, :HW]
    return out2d.reshape(N, C, H, W)


def _reference(x_nchw, w1, b1, w2, b2):
    # Pure-JAX reference of the PyTorch forward.
    y = jnp.mean(x_nchw, axis=(2, 3), keepdims=True)                 # (N, C, 1, 1)
    y = jnp.einsum('hc,nc->nh', w1, y[:, :, 0, 0]) + b1              # (N, hidden)
    y = jnp.maximum(y, 0.0)
    y = jnp.einsum('ch,nh->nc', w2, y) + b2                          # (N, C)
    y = jax.nn.sigmoid(y)
    return x_nchw * y[:, :, None, None]


if __name__ == "__main__":
    # Module config: dim=4, growth_rate=2.0 -> hidden_dim=2
    N, C, H, W = 2, 4, 16, 16
    hidden = int(C // 2.0)

    key = jax.random.PRNGKey(0)
    kx, k1, k2, k3, k4 = jax.random.split(key, 5)

    x = jax.random.normal(kx, (N, C, H, W), dtype=jnp.float32)
    # Deterministic synthetic parameters (shapes match nn.Conv2d(dim, hidden, 1) / (hidden, dim, 1))
    w1 = jax.random.normal(k1, (hidden, C), dtype=jnp.float32) * 0.5   # conv1 weight (out, in)
    b1 = jax.random.normal(k2, (hidden,), dtype=jnp.float32) * 0.1
    w2 = jax.random.normal(k3, (C, hidden), dtype=jnp.float32) * 0.5   # conv2 weight (out, in)
    b2 = jax.random.normal(k4, (C,), dtype=jnp.float32) * 0.1

    out = jax.block_until_ready(local_forward(x, w1, b1, w2, b2))

    ref = _reference(x, w1, b1, w2, b2)
    assert out.shape == (N, C, H, W)
    assert jnp.allclose(out, ref, atol=1e-5, rtol=1e-5), "mismatch vs reference"

    print("KERNEL_OK")
</pallas_src>

<mosaic_0001>
module attributes {stable_mosaic.version = 11 : i64} {
  func.func @kernel(%arg0: i32, %arg1: i32, %arg2: memref<8x256xf32, #tpu.memory_space<vmem>>, %arg3: memref<8x1xf32, #tpu.memory_space<vmem>>, %arg4: memref<8x128xf32, #tpu.memory_space<vmem>>) attributes {dimension_semantics = [#tpu.dimension_semantics<parallel>, #tpu.dimension_semantics<arbitrary>], iteration_bounds = array<i64: 1, 1>, scalar_prefetch = 0 : i64, scratch_operands = 1 : i64, tpu.core_type = #tpu.core_type<tc>, window_params = [{transform_indices = @transform_0, window_bounds = array<i64: 8, 256>}, {transform_indices = @transform_1, window_bounds = array<i64: 8, 1>}]} {
    %c0_i32 = arith.constant 0 : i32
    %0 = arith.cmpi eq, %arg1, %c0_i32 : i32
    %1 = arith.extui %0 : i1 to i32
    %c0_i32_0 = arith.constant 0 : i32
    %2 = arith.cmpi ne, %1, %c0_i32_0 : i32
    scf.if %2 {
      %cst = arith.constant 0.000000e+00 : f32
      %12 = vector.broadcast %cst : f32 to vector<8x128xf32>
      %c0_9 = arith.constant 0 : index
      %c0_10 = arith.constant 0 : index
      %13 = vector.load %arg4[%c0_9, %c0_10] : memref<8x128xf32, #tpu.memory_space<vmem>>, vector<8x128xf32>
      tpu.vector_store %arg4[%c0_9, %c0_10], %12 {strides = array<i32>} : memref<8x128xf32, #tpu.memory_space<vmem>>, vector<8x128xf32>,
    } else {
    }
    %c0 = arith.constant 0 : index
    %c0_1 = arith.constant 0 : index
    %3 = vector.load %arg2[%c0, %c0_1] : memref<8x256xf32, #tpu.memory_space<vmem>>, vector<8x128xf32>
    %c0_2 = arith.constant 0 : index
    %c128 = arith.constant 128 : index
    %4 = vector.load %arg2[%c0_2, %c128] : memref<8x256xf32, #tpu.memory_space<vmem>>, vector<8x128xf32>
    %5 = arith.addf %3, %4 : vector<8x128xf32>
    %c0_3 = arith.constant 0 : index
    %c0_4 = arith.constant 0 : index
    %6 = vector.load %arg4[%c0_3, %c0_4] : memref<8x128xf32, #tpu.memory_space<vmem>>, vector<8x128xf32>
    %7 = arith.addf %6, %5 : vector<8x128xf32>
    %c0_5 = arith.constant 0 : index
    %c0_6 = arith.constant 0 : index
    %8 = vector.load %arg4[%c0_5, %c0_6] : memref<8x128xf32, #tpu.memory_space<vmem>>, vector<8x128xf32>
    tpu.vector_store %arg4[%c0_5, %c0_6], %7 {strides = array<i32>} : memref<8x128xf32, #tpu.memory_space<vmem>>, vector<8x128xf32>,
    %c0_i32_7 = arith.constant 0 : i32
    %9 = arith.cmpi eq, %arg1, %c0_i32_7 : i32
    %10 = arith.extui %9 : i1 to i32
    %c0_i32_8 = arith.constant 0 : i32
    %11 = arith.cmpi ne, %10, %c0_i32_8 : i32
    scf.if %11 {
      %c0_9 = arith.constant 0 : index
      %c0_10 = arith.constant 0 : index
      %12 = vector.load %arg4[%c0_9, %c0_10] : memref<8x128xf32, #tpu.memory_space<vmem>>, vector<8x128xf32>
      %cst = arith.constant dense<0.000000e+00> : vector<8xf32>
      %13 = vector.multi_reduction <add>, %12, %cst [1] : vector<8x128xf32> to vector<8xf32>
      %14 = vector.shape_cast %13 : vector<8xf32> to vector<8x1xf32>
      %cst_11 = arith.constant 3.906250e-03 : f32
      %15 = vector.broadcast %cst_11 : f32 to vector<8x1xf32>
      %16 = arith.mulf %14, %15 : vector<8x1xf32>
      %c0_12 = arith.constant 0 : index
      %c0_13 = arith.constant 0 : index
      %17 = vector.load %arg3[%c0_12, %c0_13] : memref<8x1xf32, #tpu.memory_space<vmem>>, vector<8x1xf32>
      tpu.vector_store %arg3[%c0_12, %c0_13], %16 {strides = array<i32>} : memref<8x1xf32, #tpu.memory_space<vmem>>, vector<8x1xf32>,
    } else {
    }
    return
  }
  func.func @transform_0(%arg0: i32, %arg1: i32) -> (i32, i32) {
    %c0_i32 = arith.constant 0 : i32
    return %arg0, %arg1 : i32, i32
  }
  func.func @transform_1(%arg0: i32, %arg1: i32) -> (i32, i32) {
    %c0_i32 = arith.constant 0 : i32
    %c0_i32_0 = arith.constant 0 : i32
    return %arg0, %c0_i32 : i32, i32
  }
}

</mosaic_0001>

<llo_original>
// kernel: tpu_custom_call.1
$region0: #{tpu_custom_call.1}
  #allocation0 [shape = 'u32[]', space=smem, size = 0x4, offset = 0x4, fixed_abs, tag = 'smem constant byte address 0x4 - core index']
  #allocation1 [shape = 'u32[144,128]{1,0:T(1,128)}', space=vmem, size = 0x12000, scoped, tag = 'internal scratch']
  #allocation2 [shape = 'f32[8,128]{1,0:T(8,128)}', space=vmem, size = 0x1000, scoped, tag = 'scratch operand']
  %s0 = inlined_call_operand.hbm [shape: f32[8,256], index: 0, kind: input, shape index: {}]
  %s1 = inlined_call_operand.vmem [shape: f32[8,1], index: 1, kind: output, shape index: {}]
  %s2 = sld [smem:[#allocation0]]
  $region26: #{tpu_custom_call.1} parent=0
    _
  %s4 = ssub.s32 1, %s2
  %s5 = scalar_select 0, %s4, %s2
  $region1: #{tpu_custom_call.1} parent=0
    #allocation3 [shape = 'u8[8192]{0}', space=vmem, size = 0x2000, scoped, tag = 'input window, operand 0, single buffered']
    #allocation4 [shape = 's32[1]{0}', space=sflag, size = 0x4, scoped, tag = 'scoped memory for tpu_custom_call.1']
    %6 = vsyncpa [#allocation4], 0
    // Predicated region
    $region2: #{tpu_custom_call.1} parent=1 // pred_check
      _
    $region3: #{tpu_custom_call.1} parent=1 // pred_check_branch
      %8 = sbr.rel (0) target = $region5
    $region4: #{tpu_custom_call.1} parent=1 // pred_region
      %s10 = ssub.s32 256, 256
      %11 = vsyncadd [#allocation4], %s10
      %s13 = sshll.u32 [#allocation3], 4
      %s14 = int_to_ptr.vmem [resolvable:$true] %s13
      %16 = dma.hbm_to_vmem [thread:$0]  %s0, 256, %s14, [#allocation4]
    $region5: #{tpu_custom_call.1} parent=1 // pred_fallthru
      _
    // Predicated region
    $region6: #{tpu_custom_call.1} parent=1 // pred_check
      _
    $region7: #{tpu_custom_call.1} parent=1 // pred_check_branch
      %18 = sbr.rel (0) target = $region9
    $region8: #{tpu_custom_call.1} parent=1 // pred_region
      %19 = dma.done [#allocation4], 256
    $region9: #{tpu_custom_call.1} parent=1 // pred_fallthru
      _
    %p20 = scmp.eq.s32.totalorder 0, 0
    // Predicated region
    $region10: #{tpu_custom_call.1} parent=1 // pred_check
      %p21 = pneg %p20
    $region11: #{tpu_custom_call.1} parent=1 // pred_check_branch
      %23 = sbr.rel (%p21) target = $region13
    $region12: #{tpu_custom_call.1} parent=1 // pred_region
      %24 = vst [vmem:[#allocation2] sm:$0xff] 0.0
    $region13: #{tpu_custom_call.1} parent=1 // pred_fallthru
      _
    %v25 = vld [vmem:[#allocation3] sm:$0xff]
    %v26 = vld [vmem:[#allocation3 + $0x8] sm:$0xff]
    %v27 = vadd.f32 %v25, %v26
    %v28 = vld [vmem:[#allocation2] sm:$0xff]
    %v29 = vadd.f32 %v28, %v27
    %30 = vst [vmem:[#allocation2] sm:$0xff] %v29
    // Predicated region
    $region14: #{tpu_custom_call.1} parent=1 // pred_check
      %p31 = pneg %p20
    $region15: #{tpu_custom_call.1} parent=1 // pred_check_branch
      %33 = sbr.rel (%p31) target = $region17
    $region16: #{tpu_custom_call.1} parent=1 // pred_region
      %v34 = vld [vmem:[#allocation2] sm:$0xff]
      %35 = vadd.xlane.f32.xlu0 %v34
      %v36 = vpop.xlane.xlu0 %35
      %v37 = vmul.f32 %v36, 0.00390625
      %vm38 = vcmask 7168
      %39 = vst.msk [vmem:[%s1] sm:$0xff] %vm38, %v37
    $region17: #{tpu_custom_call.1} parent=1 // pred_fallthru
      _
    // Predicated region
    $region18: #{tpu_custom_call.1} parent=1 // pred_check
      _
    $region19: #{tpu_custom_call.1} parent=1 // pred_check_branch
      %41 = sbr.rel (0) target = $region21
    $region20: #{tpu_custom_call.1} parent=1 // pred_region
      _
    $region21: #{tpu_custom_call.1} parent=1 // pred_fallthru
      _
    // Predicated region
    $region22: #{tpu_custom_call.1} parent=1 // pred_check
      _
    $region23: #{tpu_custom_call.1} parent=1 // pred_check_branch
      %43 = sbr.rel (0) target = $region25
    $region24: #{tpu_custom_call.1} parent=1 // pred_region
      _
    $region25: #{tpu_custom_call.1} parent=1 // pred_fallthru
      _
    %44 = vsyncpa [#allocation4], 1

</llo_original>
